<compile_context>
chip_gen: v7x
topology: tpu7x:2x2x1
jax: 0.10.0
libtpu: 0.0.40
codegen_flags: <defaults>
</compile_context>

<pallas_src>
import numpy as np

import jax
import jax.numpy as jnp
from jax.experimental import pallas as pl
from jax.experimental.pallas import tpu as pltpu


NC_PAD = 128  # lane-dense classifier width (true num_classes sliced out in the wrapper)


# --------------------------------------------------------------------------------------
# Kernel: pooled-flatten matmul -> Linear -> ReLU -> (Dropout=id) -> Linear, fully fused
# --------------------------------------------------------------------------------------
def _early_exit_kernel(x_ref, pm_ref, w1_ref, b1_ref, w2_ref, b2_ref, o_ref):
    # x_ref : (TB, C*H*W)   bf16  batch tile of flattened NCHW samples
    # pm_ref: (C*H*W, C*16) bf16  constant AdaptiveAvgPool2d((4,4)) + Flatten matrix
    # w1_ref: (C*16, 512)   bf16  first Linear weight, (in, out) layout
    # b1_ref: (1, 512)      f32
    # w2_ref: (512, NC_PAD) bf16  second Linear weight, zero-padded to 128 columns
    # b2_ref: (1, NC_PAD)   f32
    # o_ref : (TB, NC_PAD)  f32
    x = x_ref[...]                                                          # (TB, K) bf16

    # AdaptiveAvgPool2d((4,4)) + Flatten as one long-K MXU contraction (f32 accumulate).
    feat = jnp.dot(x, pm_ref[...], preferred_element_type=jnp.float32)      # (TB, C*16)

    # Linear(C*16 -> 512) + bias + ReLU (f32 elementwise epilogue).
    h = jnp.dot(feat.astype(jnp.bfloat16), w1_ref[...],
                preferred_element_type=jnp.float32) + b1_ref[...]
    h = jnp.maximum(h, 0.0)

    # TODO(synk): Dropout(0.5) is identity (eval mode).

    # Linear(512 -> num_classes), lane-dense padded output.
    logits = jnp.dot(h.astype(jnp.bfloat16), w2_ref[...],
                     preferred_element_type=jnp.float32) + b2_ref[...]
    o_ref[...] = logits.astype(o_ref.dtype)


# --------------------------------------------------------------------------------------
# Wrapper helpers
# --------------------------------------------------------------------------------------
def _round_up(x, m):
    return ((x + m - 1) // m) * m


def _choose_batch_tile(n):
    """Batch tile: multiple of 8, up to 256 (MXU height); >=2 grid steps when batch allows."""
    tb = 256
    if n < 2 * tb:
        tb = max(8, _round_up((n + 1) // 2, 8))
    return tb


def _pool_flatten_matrix(C, H, W):
    """Constant matrix folding AdaptiveAvgPool2d((4,4)) + Flatten (PyTorch NCHW order)."""
    assert H % 4 == 0 and W % 4 == 0, "adaptive windows only for H,W divisible by 4"
    hp, wp = H // 4, W // 4
    ch = np.arange(C)[:, None, None]
    hh = np.arange(H)[None, :, None]
    ww = np.arange(W)[None, None, :]
    rows = (ch * H * W + hh * W + ww).ravel()
    cols = (ch * 16 + (hh // hp) * 4 + (ww // wp)).ravel()
    m = np.zeros((C * H * W, C * 16), np.float32)
    m[rows, cols] = 1.0 / (hp * wp)
    return m


# --------------------------------------------------------------------------------------
# Forward pass
# --------------------------------------------------------------------------------------
@jax.jit
def early_exit_forward(x_nchw, params):
    """EarlyExitBlock.forward. x: (N, C, H, W) NCHW float. Returns (N, num_classes) f32."""
    N, C, H, W = x_nchw.shape
    K = C * H * W
    F = C * 16
    HID = params["w1"].shape[1]
    NC = params["w2"].shape[1]
    assert NC <= NC_PAD

    TB = _choose_batch_tile(N)
    N_pad = _round_up(N, TB)

    # Streaming operand: flattened, bf16 (halves HBM traffic), batch padded to a TB multiple.
    x_rows = x_nchw.reshape(N, K).astype(jnp.bfloat16)
    if N_pad != N:
        x_rows = jnp.pad(x_rows, ((0, N_pad - N), (0, 0)))

    # Grid-invariant operands (fetched once, resident in VMEM).
    pool_m = jnp.asarray(_pool_flatten_matrix(C, H, W), dtype=jnp.bfloat16)   # (K, F)
    w1 = params["w1"].astype(jnp.bfloat16)                                    # (F, HID)
    b1 = params["b1"].reshape(1, HID).astype(jnp.float32)
    w2 = jnp.pad(params["w2"], ((0, 0), (0, NC_PAD - NC))).astype(jnp.bfloat16)  # (HID, 128)
    b2 = jnp.pad(params["b2"].reshape(1, NC), ((0, 0), (0, NC_PAD - NC))).astype(jnp.float32)

    out = pl.pallas_call(
        _early_exit_kernel,
        out_shape=jax.ShapeDtypeStruct((N_pad, NC_PAD), jnp.float32),
        grid=(pl.cdiv(N_pad, TB),),
        in_specs=[
            pl.BlockSpec((TB, K), lambda n: (n, 0)),        # x batch tile (streaming)
            pl.BlockSpec((K, F), lambda n: (0, 0)),         # pooling/flatten matrix
            pl.BlockSpec((F, HID), lambda n: (0, 0)),       # W1
            pl.BlockSpec((1, HID), lambda n: (0, 0)),       # b1
            pl.BlockSpec((HID, NC_PAD), lambda n: (0, 0)),  # W2 (lane-dense padded)
            pl.BlockSpec((1, NC_PAD), lambda n: (0, 0)),    # b2
        ],
        out_specs=pl.BlockSpec((TB, NC_PAD), lambda n: (n, 0)),
        compiler_params=pltpu.CompilerParams(
            dimension_semantics=("parallel",),              # both TCs on v7x when grid >= 2
        ),
    )(x_rows, pool_m, w1, b1, w2, b2)

    return out[:N, :NC]


# --------------------------------------------------------------------------------------
# Pure-JAX reference (for correctness check)
# --------------------------------------------------------------------------------------
def ref_early_exit(x_nchw, p):
    N, C, H, W = x_nchw.shape
    hp, wp = H // 4, W // 4
    pooled = x_nchw.reshape(N, C, 4, hp, 4, wp).mean(axis=(3, 5))   # AdaptiveAvgPool2d((4,4))
    feat = pooled.reshape(N, C * 16)                                # Flatten
    h = jax.nn.relu(feat @ p["w1"] + p["b1"])                       # Linear + ReLU
    return h @ p["w2"] + p["b2"]                                    # Dropout=id (eval), Linear


# --------------------------------------------------------------------------------------
# Main
# --------------------------------------------------------------------------------------
if __name__ == "__main__":
    N, C, H, W = 2, 4, 16, 16
    HIDDEN, NUM_CLASSES = 512, 10

    key = jax.random.PRNGKey(0)
    kx, k1, k2, k3, k4 = jax.random.split(key, 5)

    fan1 = C * 16
    params = {
        # Linear weights stored as (in, out) — transpose of PyTorch's (out, in) layout.
        "w1": jax.random.uniform(k1, (fan1, HIDDEN), jnp.float32, -1.0, 1.0) / np.sqrt(fan1),
        "b1": jax.random.uniform(k2, (HIDDEN,), jnp.float32, -1.0, 1.0) / np.sqrt(fan1),
        "w2": jax.random.uniform(k3, (HIDDEN, NUM_CLASSES), jnp.float32, -1.0, 1.0) / np.sqrt(HIDDEN),
        "b2": jax.random.uniform(k4, (NUM_CLASSES,), jnp.float32, -1.0, 1.0) / np.sqrt(HIDDEN),
    }
    x = jax.random.normal(kx, (N, C, H, W), jnp.float32)

    out = jax.block_until_ready(early_exit_forward(x, params))
    ref = jax.block_until_ready(ref_early_exit(x, params))

    assert out.shape == (N, NUM_CLASSES), out.shape
    # bf16 MXU inputs with f32 accumulation: allow ~1e-2-level deviation from the f32 ref.
    max_err = float(jnp.max(jnp.abs(out - ref)))
    assert max_err < 3e-2, f"mismatch vs reference, max abs err = {max_err}"

    print("KERNEL_OK")
</pallas_src>

<mosaic_0001>
module attributes {stable_mosaic.version = 11 : i64} {
  func.func @_early_exit_kernel(%arg0: i32, %arg1: memref<8x1024xbf16, #tpu.memory_space<vmem>>, %arg2: memref<1024x64xbf16, #tpu.memory_space<vmem>>, %arg3: memref<64x512xbf16, #tpu.memory_space<vmem>>, %arg4: memref<1x512xf32, #tpu.memory_space<vmem>>, %arg5: memref<512x128xbf16, #tpu.memory_space<vmem>>, %arg6: memref<1x128xf32, #tpu.memory_space<vmem>>, %arg7: memref<8x128xf32, #tpu.memory_space<vmem>>) attributes {dimension_semantics = [#tpu.dimension_semantics<parallel>], iteration_bounds = array<i64: 1>, scalar_prefetch = 0 : i64, scratch_operands = 0 : i64, tpu.core_type = #tpu.core_type<tc>, window_params = [{transform_indices = @transform_0, window_bounds = array<i64: 8, 1024>}, {pipeline_mode = #tpu.pipeline_mode<synchronous>, transform_indices = @transform_1, window_bounds = array<i64: 1024, 64>}, {pipeline_mode = #tpu.pipeline_mode<synchronous>, transform_indices = @transform_2, window_bounds = array<i64: 64, 512>}, {pipeline_mode = #tpu.pipeline_mode<synchronous>, transform_indices = @transform_3, window_bounds = array<i64: 1, 512>}, {pipeline_mode = #tpu.pipeline_mode<synchronous>, transform_indices = @transform_4, window_bounds = array<i64: 512, 128>}, {pipeline_mode = #tpu.pipeline_mode<synchronous>, transform_indices = @transform_5, window_bounds = array<i64: 1, 128>}, {transform_indices = @transform_6, window_bounds = array<i64: 8, 128>}]} {
    %c0 = arith.constant 0 : index
    %c0_0 = arith.constant 0 : index
    %0 = vector.load %arg1[%c0, %c0_0] : memref<8x1024xbf16, #tpu.memory_space<vmem>>, vector<8x1024xbf16>
    %c0_1 = arith.constant 0 : index
    %c0_2 = arith.constant 0 : index
    %1 = vector.load %arg2[%c0_1, %c0_2] : memref<1024x64xbf16, #tpu.memory_space<vmem>>, vector<1024x64xbf16>
    %cst = arith.constant dense<0.000000e+00> : vector<8x64xf32>
    %2 = tpu.matmul %0, %1, %cst {dimension_numbers = #tpu.dot_dimension_numbers<[1], [0], [0], [1], [0, 0, 1, 1], [], []>} : vector<8x1024xbf16>, vector<1024x64xbf16>, vector<8x64xf32> -> vector<8x64xf32>
    %3 = arith.truncf %2 : vector<8x64xf32> to vector<8x64xbf16>
    %c0_3 = arith.constant 0 : index
    %c0_4 = arith.constant 0 : index
    %4 = vector.load %arg3[%c0_3, %c0_4] : memref<64x512xbf16, #tpu.memory_space<vmem>>, vector<64x512xbf16>
    %cst_5 = arith.constant dense<0.000000e+00> : vector<8x512xf32>
    %5 = tpu.matmul %3, %4, %cst_5 {dimension_numbers = #tpu.dot_dimension_numbers<[1], [0], [0], [1], [0, 0, 1, 1], [], []>} : vector<8x64xbf16>, vector<64x512xbf16>, vector<8x512xf32> -> vector<8x512xf32>
    %c0_6 = arith.constant 0 : index
    %c0_7 = arith.constant 0 : index
    %6 = vector.load %arg4[%c0_6, %c0_7] : memref<1x512xf32, #tpu.memory_space<vmem>>, vector<1x512xf32>
    %7 = vector.broadcast %6 : vector<1x512xf32> to vector<8x512xf32>
    %8 = arith.addf %5, %7 : vector<8x512xf32>
    %cst_8 = arith.constant 0.000000e+00 : f32
    %9 = vector.broadcast %cst_8 : f32 to vector<8x512xf32>
    %10 = arith.maximumf %8, %9 : vector<8x512xf32>
    %11 = arith.truncf %10 : vector<8x512xf32> to vector<8x512xbf16>
    %c0_9 = arith.constant 0 : index
    %c0_10 = arith.constant 0 : index
    %12 = vector.load %arg5[%c0_9, %c0_10] : memref<512x128xbf16, #tpu.memory_space<vmem>>, vector<512x128xbf16>
    %cst_11 = arith.constant dense<0.000000e+00> : vector<8x128xf32>
    %13 = tpu.matmul %11, %12, %cst_11 {dimension_numbers = #tpu.dot_dimension_numbers<[1], [0], [0], [1], [0, 0, 1, 1], [], []>} : vector<8x512xbf16>, vector<512x128xbf16>, vector<8x128xf32> -> vector<8x128xf32>
    %c0_12 = arith.constant 0 : index
    %c0_13 = arith.constant 0 : index
    %14 = vector.load %arg6[%c0_12, %c0_13] : memref<1x128xf32, #tpu.memory_space<vmem>>, vector<1x128xf32>
    %15 = vector.broadcast %14 : vector<1x128xf32> to vector<8x128xf32>
    %16 = arith.addf %13, %15 : vector<8x128xf32>
    %c0_14 = arith.constant 0 : index
    %c0_15 = arith.constant 0 : index
    %17 = vector.load %arg7[%c0_14, %c0_15] : memref<8x128xf32, #tpu.memory_space<vmem>>, vector<8x128xf32>
    tpu.vector_store %arg7[%c0_14, %c0_15], %16 {strides = array<i32>} : memref<8x128xf32, #tpu.memory_space<vmem>>, vector<8x128xf32>,
    return
  }
  func.func @transform_0(%arg0: i32) -> (i32, i32) {
    %c0_i32 = arith.constant 0 : i32
    %c0_i32_0 = arith.constant 0 : i32
    return %arg0, %c0_i32 : i32, i32
  }
  func.func @transform_1(%arg0: i32) -> (i32, i32) {
    %c0_i32 = arith.constant 0 : i32
    %c0_i32_0 = arith.constant 0 : i32
    %c0_i32_1 = arith.constant 0 : i32
    return %c0_i32, %c0_i32_0 : i32, i32
  }
  func.func @transform_2(%arg0: i32) -> (i32, i32) {
    %c0_i32 = arith.constant 0 : i32
    %c0_i32_0 = arith.constant 0 : i32
    %c0_i32_1 = arith.constant 0 : i32
    return %c0_i32, %c0_i32_0 : i32, i32
  }
  func.func @transform_3(%arg0: i32) -> (i32, i32) {
    %c0_i32 = arith.constant 0 : i32
    %c0_i32_0 = arith.constant 0 : i32
    %c0_i32_1 = arith.constant 0 : i32
    return %c0_i32, %c0_i32_0 : i32, i32
  }
  func.func @transform_4(%arg0: i32) -> (i32, i32) {
    %c0_i32 = arith.constant 0 : i32
    %c0_i32_0 = arith.constant 0 : i32
    %c0_i32_1 = arith.constant 0 : i32
    return %c0_i32, %c0_i32_0 : i32, i32
  }
  func.func @transform_5(%arg0: i32) -> (i32, i32) {
    %c0_i32 = arith.constant 0 : i32
    %c0_i32_0 = arith.constant 0 : i32
    %c0_i32_1 = arith.constant 0 : i32
    return %c0_i32, %c0_i32_0 : i32, i32
  }
  func.func @transform_6(%arg0: i32) -> (i32, i32) {
    %c0_i32 = arith.constant 0 : i32
    %c0_i32_0 = arith.constant 0 : i32
    return %arg0, %c0_i32 : i32, i32
  }
}

</mosaic_0001>

<llo_original>
// kernel: early_exit_forward.1
$region0: #{early_exit_forward.1}
  #allocation0 [shape = 'u32[]', space=smem, size = 0x4, offset = 0x4, fixed_abs, tag = 'smem constant byte address 0x4 - core index']
  #allocation1 [shape = 'u32[144,128]{1,0:T(1,128)}', space=vmem, size = 0x12000, scoped, tag = 'internal scratch']
  %s0 = inlined_call_operand.vmem [shape: bf16[8,1024], index: 0, kind: input, shape index: {}]
  %s1 = inlined_call_operand.vmem [shape: bf16[1024,64], index: 1, kind: input, shape index: {}]
  %s2 = inlined_call_operand.vmem [shape: bf16[64,512], index: 2, kind: input, shape index: {}]
  %s3 = inlined_call_operand.vmem [shape: f32[1,512], index: 3, kind: input, shape index: {}]
  %s4 = inlined_call_operand.vmem [shape: bf16[512,128], index: 4, kind: input, shape index: {}]
  %s5 = inlined_call_operand.vmem [shape: f32[1,128], index: 5, kind: input, shape index: {}]
  %s6 = inlined_call_operand.vmem [shape: f32[8,128], index: 6, kind: output, shape index: {}]
  %s7 = sld [smem:[#allocation0]]
  $region34: #{early_exit_forward.1} parent=0
    _
  %s9 = ssub.s32 1, %s7
  %s10 = scalar_select 0, %s9, %s7
  // Predicated region
  $region2: #{early_exit_forward.1} parent=0 // pred_check
    _
  $region3: #{early_exit_forward.1} parent=0 // pred_check_branch
    %12 = sbr.rel (0) target = $region5
  $region4: #{early_exit_forward.1} parent=0 // pred_region
    _
  $region5: #{early_exit_forward.1} parent=0 // pred_fallthru
    _
  // Predicated region
  $region6: #{early_exit_forward.1} parent=0 // pred_check
    _
  $region7: #{early_exit_forward.1} parent=0 // pred_check_branch
    %14 = sbr.rel (0) target = $region9
  $region8: #{early_exit_forward.1} parent=0 // pred_region
    _
  $region9: #{early_exit_forward.1} parent=0 // pred_fallthru
    _
  // Predicated region
  $region10: #{early_exit_forward.1} parent=0 // pred_check
    _
  $region11: #{early_exit_forward.1} parent=0 // pred_check_branch
    %16 = sbr.rel (0) target = $region13
  $region12: #{early_exit_forward.1} parent=0 // pred_region
    _
  $region13: #{early_exit_forward.1} parent=0 // pred_fallthru
    _
  // Predicated region
  $region14: #{early_exit_forward.1} parent=0 // pred_check
    _
  $region15: #{early_exit_forward.1} parent=0 // pred_check_branch
    %18 = sbr.rel (0) target = $region17
  $region16: #{early_exit_forward.1} parent=0 // pred_region
    _
  $region17: #{early_exit_forward.1} parent=0 // pred_fallthru
    _
  // Predicated region
  $region18: #{early_exit_forward.1} parent=0 // pred_check
    _
  $region19: #{early_exit_forward.1} parent=0 // pred_check_branch
    %20 = sbr.rel (0) target = $region21
  $region20: #{early_exit_forward.1} parent=0 // pred_region
    _
  $region21: #{early_exit_forward.1} parent=0 // pred_fallthru
    _
  // Predicated region
  $region22: #{early_exit_forward.1} parent=0 // pred_check
    _
  $region23: #{early_exit_forward.1} parent=0 // pred_check_branch
    %22 = sbr.rel (0) target = $region25
  $region24: #{early_exit_forward.1} parent=0 // pred_region
    _
  $region25: #{early_exit_forward.1} parent=0 // pred_fallthru
    _
  %v24 = vld [vmem:[%s0] sm:$0xff]
  %v25 = vld [vmem:[%s0 + $0x8] sm:$0xff]
  %v26 = vld [vmem:[%s0 + $0x10] sm:$0xff]
  %v27 = vld [vmem:[%s0 + $0x18] sm:$0xff]
  %v28 = vld [vmem:[%s1] sm:$0xf]
  %v29 = vld [vmem:[%s1 + $0x4] sm:$0xf]
  %v30 = vld [vmem:[%s1 + $0x8] sm:$0xf]
  %v31 = vld [vmem:[%s1 + $0xc] sm:$0xf]
  %v32 = vld [vmem:[%s1 + $0x10] sm:$0xf]
  %v33 = vld [vmem:[%s1 + $0x14] sm:$0xf]
  %v34 = vld [vmem:[%s1 + $0x18] sm:$0xf]
  %v35 = vld [vmem:[%s1 + $0x1c] sm:$0xf]
  %v36 = vld [vmem:[%s1 + $0x20] sm:$0xf]
  %v37 = vld [vmem:[%s1 + $0x24] sm:$0xf]
  %v38 = vld [vmem:[%s1 + $0x28] sm:$0xf]
  %v39 = vld [vmem:[%s1 + $0x2c] sm:$0xf]
  %v40 = vld [vmem:[%s1 + $0x30] sm:$0xf]
  %v41 = vld [vmem:[%s1 + $0x34] sm:$0xf]
  %v42 = vld [vmem:[%s1 + $0x38] sm:$0xf]
  %v43 = vld [vmem:[%s1 + $0x3c] sm:$0xf]
  %v44 = vld [vmem:[%s1 + $0x40] sm:$0xf]
  %v45 = vld [vmem:[%s1 + $0x44] sm:$0xf]
  %v46 = vld [vmem:[%s1 + $0x48] sm:$0xf]
  %v47 = vld [vmem:[%s1 + $0x4c] sm:$0xf]
  %v48 = vld [vmem:[%s1 + $0x50] sm:$0xf]
  %v49 = vld [vmem:[%s1 + $0x54] sm:$0xf]
  %v50 = vld [vmem:[%s1 + $0x58] sm:$0xf]
  %v51 = vld [vmem:[%s1 + $0x5c] sm:$0xf]
  %v52 = vld [vmem:[%s1 + $0x60] sm:$0xf]
  %v53 = vld [vmem:[%s1 + $0x64] sm:$0xf]
  %v54 = vld [vmem:[%s1 + $0x68] sm:$0xf]
  %v55 = vld [vmem:[%s1 + $0x6c] sm:$0xf]
  %v56 = vld [vmem:[%s1 + $0x70] sm:$0xf]
  %v57 = vld [vmem:[%s1 + $0x74] sm:$0xf]
  %v58 = vld [vmem:[%s1 + $0x78] sm:$0xf]
  %v59 = vld [vmem:[%s1 + $0x7c] sm:$0xf]
  %v60 = vld [vmem:[%s1 + $0x80] sm:$0xf]
  %v61 = vld [vmem:[%s1 + $0x84] sm:$0xf]
  %v62 = vld [vmem:[%s1 + $0x88] sm:$0xf]
  %v63 = vld [vmem:[%s1 + $0x8c] sm:$0xf]
  %v64 = vld [vmem:[%s1 + $0x90] sm:$0xf]
  %v65 = vld [vmem:[%s1 + $0x94] sm:$0xf]
  %v66 = vld [vmem:[%s1 + $0x98] sm:$0xf]
  %v67 = vld [vmem:[%s1 + $0x9c] sm:$0xf]
  %v68 = vld [vmem:[%s1 + $0xa0] sm:$0xf]
  %v69 = vld [vmem:[%s1 + $0xa4] sm:$0xf]
  %v70 = vld [vmem:[%s1 + $0xa8] sm:$0xf]
  %v71 = vld [vmem:[%s1 + $0xac] sm:$0xf]
  %v72 = vld [vmem:[%s1 + $0xb0] sm:$0xf]
  %v73 = vld [vmem:[%s1 + $0xb4] sm:$0xf]
  %v74 = vld [vmem:[%s1 + $0xb8] sm:$0xf]
  %v75 = vld [vmem:[%s1 + $0xbc] sm:$0xf]
  %v76 = vld [vmem:[%s1 + $0xc0] sm:$0xf]
  %v77 = vld [vmem:[%s1 + $0xc4] sm:$0xf]
  %v78 = vld [vmem:[%s1 + $0xc8] sm:$0xf]
  %v79 = vld [vmem:[%s1 + $0xcc] sm:$0xf]
  %v80 = vld [vmem:[%s1 + $0xd0] sm:$0xf]
  %v81 = vld [vmem:[%s1 + $0xd4] sm:$0xf]
  %v82 = vld [vmem:[%s1 + $0xd8] sm:$0xf]
  %v83 = vld [vmem:[%s1 + $0xdc] sm:$0xf]
  %v84 = vld [vmem:[%s1 + $0xe0] sm:$0xf]
  %v85 = vld [vmem:[%s1 + $0xe4] sm:$0xf]
  %v86 = vld [vmem:[%s1 + $0xe8] sm:$0xf]
  %v87 = vld [vmem:[%s1 + $0xec] sm:$0xf]
  %v88 = vld [vmem:[%s1 + $0xf0] sm:$0xf]
  %v89 = vld [vmem:[%s1 + $0xf4] sm:$0xf]
  %v90 = vld [vmem:[%s1 + $0xf8] sm:$0xf]
  %v91 = vld [vmem:[%s1 + $0xfc] sm:$0xf]
  %v92 = vld [vmem:[%s1 + $0x100] sm:$0xf]
  %v93 = vld [vmem:[%s1 + $0x104] sm:$0xf]
  %v94 = vld [vmem:[%s1 + $0x108] sm:$0xf]
  %v95 = vld [vmem:[%s1 + $0x10c] sm:$0xf]
  %v96 = vld [vmem:[%s1 + $0x110] sm:$0xf]
  %v97 = vld [vmem:[%s1 + $0x114] sm:$0xf]
  %v98 = vld [vmem:[%s1 + $0x118] sm:$0xf]
  %v99 = vld [vmem:[%s1 + $0x11c] sm:$0xf]
  %v100 = vld [vmem:[%s1 + $0x120] sm:$0xf]
  %v101 = vld [vmem:[%s1 + $0x124] sm:$0xf]
  %v102 = vld [vmem:[%s1 + $0x128] sm:$0xf]
  %v103 = vld [vmem:[%s1 + $0x12c] sm:$0xf]
  %v104 = vld [vmem:[%s1 + $0x130] sm:$0xf]
  %v105 = vld [vmem:[%s1 + $0x134] sm:$0xf]
  %v106 = vld [vmem:[%s1 + $0x138] sm:$0xf]
  %v107 = vld [vmem:[%s1 + $0x13c] sm:$0xf]
  %v108 = vld [vmem:[%s1 + $0x140] sm:$0xf]
  %v109 = vld [vmem:[%s1 + $0x144] sm:$0xf]
  %v110 = vld [vmem:[%s1 + $0x148] sm:$0xf]
  %v111 = vld [vmem:[%s1 + $0x14c] sm:$0xf]
  %v112 = vld [vmem:[%s1 + $0x150] sm:$0xf]
  %v113 = vld [vmem:[%s1 + $0x154] sm:$0xf]
  %v114 = vld [vmem:[%s1 + $0x158] sm:$0xf]
  %v115 = vld [vmem:[%s1 + $0x15c] sm:$0xf]
  %v116 = vld [vmem:[%s1 + $0x160] sm:$0xf]
  %v117 = vld [vmem:[%s1 + $0x164] sm:$0xf]
  %v118 = vld [vmem:[%s1 + $0x168] sm:$0xf]
  %v119 = vld [vmem:[%s1 + $0x16c] sm:$0xf]
  %v120 = vld [vmem:[%s1 + $0x170] sm:$0xf]
  %v121 = vld [vmem:[%s1 + $0x174] sm:$0xf]
  %v122 = vld [vmem:[%s1 + $0x178] sm:$0xf]
  %v123 = vld [vmem:[%s1 + $0x17c] sm:$0xf]
  %v124 = vld [vmem:[%s1 + $0x180] sm:$0xf]
  %v125 = vld [vmem:[%s1 + $0x184] sm:$0xf]
  %v126 = vld [vmem:[%s1 + $0x188] sm:$0xf]
  %v127 = vld [vmem:[%s1 + $0x18c] sm:$0xf]
  %v128 = vld [vmem:[%s1 + $0x190] sm:$0xf]
  %v129 = vld [vmem:[%s1 + $0x194] sm:$0xf]
  %v130 = vld [vmem:[%s1 + $0x198] sm:$0xf]
  %v131 = vld [vmem:[%s1 + $0x19c] sm:$0xf]
  %v132 = vld [vmem:[%s1 + $0x1a0] sm:$0xf]
  %v133 = vld [vmem:[%s1 + $0x1a4] sm:$0xf]
  %v134 = vld [vmem:[%s1 + $0x1a8] sm:$0xf]
  %v135 = vld [vmem:[%s1 + $0x1ac] sm:$0xf]
  %v136 = vld [vmem:[%s1 + $0x1b0] sm:$0xf]
  %v137 = vld [vmem:[%s1 + $0x1b4] sm:$0xf]
  %v138 = vld [vmem:[%s1 + $0x1b8] sm:$0xf]
  %v139 = vld [vmem:[%s1 + $0x1bc] sm:$0xf]
  %v140 = vld [vmem:[%s1 + $0x1c0] sm:$0xf]
  %v141 = vld [vmem:[%s1 + $0x1c4] sm:$0xf]
  %v142 = vld [vmem:[%s1 + $0x1c8] sm:$0xf]
  %v143 = vld [vmem:[%s1 + $0x1cc] sm:$0xf]
  %v144 = vld [vmem:[%s1 + $0x1d0] sm:$0xf]
  %v145 = vld [vmem:[%s1 + $0x1d4] sm:$0xf]
  %v146 = vld [vmem:[%s1 + $0x1d8] sm:$0xf]
  %v147 = vld [vmem:[%s1 + $0x1dc] sm:$0xf]
  %v148 = vld [vmem:[%s1 + $0x1e0] sm:$0xf]
  %v149 = vld [vmem:[%s1 + $0x1e4] sm:$0xf]
  %v150 = vld [vmem:[%s1 + $0x1e8] sm:$0xf]
  %v151 = vld [vmem:[%s1 + $0x1ec] sm:$0xf]
  %v152 = vld [vmem:[%s1 + $0x1f0] sm:$0xf]
  %v153 = vld [vmem:[%s1 + $0x1f4] sm:$0xf]
  %v154 = vld [vmem:[%s1 + $0x1f8] sm:$0xf]
  %v155 = vld [vmem:[%s1 + $0x1fc] sm:$0xf]
  %v160 = vunpack.c.l.b16 %v24
  %v161 = vunpack.c.h.b16 %v24
  %v162 = vunpack.c.l.b16 %v25
  %v163 = vunpack.c.h.b16 %v25
  %v164 = vunpack.c.l.b16 %v26
  %v165 = vunpack.c.h.b16 %v26
  %v166 = vunpack.c.l.b16 %v27
  %v167 = vunpack.c.h.b16 %v27
  %v168 = vpack.c.b16 %v160, %v160
  %v169 = vpack.c.b16 %v161, %v161
  %v170 = vpack.c.b16 %v162, %v162
  %v171 = vpack.c.b16 %v163, %v163
  %v172 = vpack.c.b16 %v164, %v164
  %v173 = vpack.c.b16 %v165, %v165
  %v174 = vpack.c.b16 %v166, %v166
  %v175 = vpack.c.b16 %v167, %v167
  %v312 = vunpack.c.l.b16 %v28
  %v313 = vunpack.c.l.b16 %v29
  %v314 = vunpack.c.l.b16 %v30
  %v315 = vunpack.c.l.b16 %v31
  %v316 = vunpack.c.l.b16 %v32
  %v317 = vunpack.c.l.b16 %v33
  %v318 = vunpack.c.l.b16 %v34
  %v319 = vunpack.c.l.b16 %v35
  %v320 = vunpack.c.l.b16 %v36
  %v321 = vunpack.c.l.b16 %v37
  %v322 = vunpack.c.l.b16 %v38
  %v323 = vunpack.c.l.b16 %v39
  %v324 = vunpack.c.l.b16 %v40
  %v325 = vunpack.c.l.b16 %v41
  %v326 = vunpack.c.l.b16 %v42
  %v327 = vunpack.c.l.b16 %v43
  %v328 = vunpack.c.l.b16 %v44
  %v329 = vunpack.c.l.b16 %v45
  %v330 = vunpack.c.l.b16 %v46
  %v331 = vunpack.c.l.b16 %v47
  %v332 = vunpack.c.l.b16 %v48
  %v333 = vunpack.c.l.b16 %v49
  %v334 = vunpack.c.l.b16 %v50
  %v335 = vunpack.c.l.b16 %v51
  %v336 = vunpack.c.l.b16 %v52
  %v337 = vunpack.c.l.b16 %v53
  %v338 = vunpack.c.l.b16 %v54
  %v339 = vunpack.c.l.b16 %v55
  %v340 = vunpack.c.l.b16 %v56
  %v341 = vunpack.c.l.b16 %v57
  %v342 = vunpack.c.l.b16 %v58
  %v343 = vunpack.c.l.b16 %v59
  %v344 = vunpack.c.l.b16 %v60
  %v345 = vunpack.c.l.b16 %v61
  %v346 = vunpack.c.l.b16 %v62
  %v347 = vunpack.c.l.b16 %v63
  %v348 = vunpack.c.l.b16 %v64
  %v349 = vunpack.c.l.b16 %v65
  %v350 = vunpack.c.l.b16 %v66
  %v351 = vunpack.c.l.b16 %v67
  %v352 = vunpack.c.l.b16 %v68
  %v353 = vunpack.c.l.b16 %v69
  %v354 = vunpack.c.l.b16 %v70
  %v355 = vunpack.c.l.b16 %v71
  %v356 = vunpack.c.l.b16 %v72
  %v357 = vunpack.c.l.b16 %v73
  %v358 = vunpack.c.l.b16 %v74
  %v359 = vunpack.c.l.b16 %v75
  %v360 = vunpack.c.l.b16 %v76
  %v361 = vunpack.c.l.b16 %v77
  %v362 = vunpack.c.l.b16 %v78
  %v363 = vunpack.c.l.b16 %v79
  %v364 = vunpack.c.l.b16 %v80
  %v365 = vunpack.c.l.b16 %v81
  %v366 = vunpack.c.l.b16 %v82
  %v367 = vunpack.c.l.b16 %v83
  %v368 = vunpack.c.l.b16 %v84
  %v369 = vunpack.c.l.b16 %v85
  %v370 = vunpack.c.l.b16 %v86
  %v371 = vunpack.c.l.b16 %v87
  %v372 = vunpack.c.l.b16 %v88
  %v373 = vunpack.c.l.b16 %v89
  %v374 = vunpack.c.l.b16 %v90
  %v375 = vunpack.c.l.b16 %v91
  %v376 = vunpack.c.l.b16 %v92
  %v377 = vunpack.c.l.b16 %v93
  %v378 = vunpack.c.l.b16 %v94
  %v379 = vunpack.c.l.b16 %v95
  %v380 = vunpack.c.l.b16 %v96
  %v381 = vunpack.c.l.b16 %v97
  %v382 = vunpack.c.l.b16 %v98
  %v383 = vunpack.c.l.b16 %v99
  %v384 = vunpack.c.l.b16 %v100
  %v385 = vunpack.c.l.b16 %v101
  %v386 = vunpack.c.l.b16 %v102
  %v387 = vunpack.c.l.b16 %v103
  %v388 = vunpack.c.l.b16 %v104
  %v389 = vunpack.c.l.b16 %v105
  %v390 = vunpack.c.l.b16 %v106
  %v391 = vunpack.c.l.b16 %v107
  %v392 = vunpack.c.l.b16 %v108
  %v393 = vunpack.c.l.b16 %v109
  %v394 = vunpack.c.l.b16 %v110
  %v395 = vunpack.c.l.b16 %v111
  %v396 = vunpack.c.l.b16 %v112
  %v397 = vunpack.c.l.b16 %v113
  %v398 = vunpack.c.l.b16 %v114
  %v399 = vunpack.c.l.b16 %v115
  %v400 = vunpack.c.l.b16 %v116
  %v401 = vunpack.c.l.b16 %v117
  %v402 = vunpack.c.l.b16 %v118
  %v403 = vunpack.c.l.b16 %v119
  %v404 = vunpack.c.l.b16 %v120
  %v405 = vunpack.c.l.b16 %v121
  %v406 = vunpack.c.l.b16 %v122
  %v407 = vunpack.c.l.b16 %v123
  %v408 = vunpack.c.l.b16 %v124
  %v409 = vunpack.c.l.b16 %v125
  %v410 = vunpack.c.l.b16 %v126
  %v411 = vunpack.c.l.b16 %v127
  %v412 = vunpack.c.l.b16 %v128
  %v413 = vunpack.c.l.b16 %v129
  %v414 = vunpack.c.l.b16 %v130
  %v415 = vunpack.c.l.b16 %v131
  %v416 = vunpack.c.l.b16 %v132
  %v417 = vunpack.c.l.b16 %v133
  %v418 = vunpack.c.l.b16 %v134
  %v419 = vunpack.c.l.b16 %v135
  %v420 = vunpack.c.l.b16 %v136
  %v421 = vunpack.c.l.b16 %v137
  %v422 = vunpack.c.l.b16 %v138
  %v423 = vunpack.c.l.b16 %v139
  %v424 = vunpack.c.l.b16 %v140
  %v425 = vunpack.c.l.b16 %v141
  %v426 = vunpack.c.l.b16 %v142
  %v427 = vunpack.c.l.b16 %v143
  %v428 = vunpack.c.l.b16 %v144
  %v429 = vunpack.c.l.b16 %v145
  %v430 = vunpack.c.l.b16 %v146
  %v431 = vunpack.c.l.b16 %v147
  %v432 = vunpack.c.l.b16 %v148
  %v433 = vunpack.c.l.b16 %v149
  %v434 = vunpack.c.l.b16 %v150
  %v435 = vunpack.c.l.b16 %v151
  %v436 = vunpack.c.l.b16 %v152
  %v437 = vunpack.c.l.b16 %v153
  %v438 = vunpack.c.l.b16 %v154
  %v439 = vunpack.c.l.b16 %v155
  %v440 = vpack.c.b16 %v313, %v312
  %v441 = vpack.c.b16 %v315, %v314
  %v442 = vpack.c.b16 %v317, %v316
  %v443 = vpack.c.b16 %v319, %v318
  %v444 = vpack.c.b16 %v321, %v320
  %v445 = vpack.c.b16 %v323, %v322
  %v446 = vpack.c.b16 %v325, %v324
  %v447 = vpack.c.b16 %v327, %v326
  %v448 = vpack.c.b16 %v329, %v328
  %v449 = vpack.c.b16 %v331, %v330
  %v450 = vpack.c.b16 %v333, %v332
  %v451 = vpack.c.b16 %v335, %v334
  %v452 = vpack.c.b16 %v337, %v336
  %v453 = vpack.c.b16 %v339, %v338
  %v454 = vpack.c.b16 %v341, %v340
  %v455 = vpack.c.b16 %v343, %v342
  %v456 = vpack.c.b16 %v345, %v344
  %v457 = vpack.c.b16 %v347, %v346
  %v458 = vpack.c.b16 %v349, %v348
  %v459 = vpack.c.b16 %v351, %v350
  %v460 = vpack.c.b16 %v353, %v352
  %v461 = vpack.c.b16 %v355, %v354
  %v462 = vpack.c.b16 %v357, %v356
  %v463 = vpack.c.b16 %v359, %v358
  %v464 = vpack.c.b16 %v361, %v360
  %v465 = vpack.c.b16 %v363, %v362
  %v466 = vpack.c.b16 %v365, %v364
  %v467 = vpack.c.b16 %v367, %v366
  %v468 = vpack.c.b16 %v369, %v368
  %v469 = vpack.c.b16 %v371, %v370
  %v470 = vpack.c.b16 %v373, %v372
  %v471 = vpack.c.b16 %v375, %v374
  %v472 = vpack.c.b16 %v377, %v376
  %v473 = vpack.c.b16 %v379, %v378
  %v474 = vpack.c.b16 %v381, %v380
  %v475 = vpack.c.b16 %v383, %v382
  %v476 = vpack.c.b16 %v385, %v384
  %v477 = vpack.c.b16 %v387, %v386
  %v478 = vpack.c.b16 %v389, %v388
  %v479 = vpack.c.b16 %v391, %v390
  %v480 = vpack.c.b16 %v393, %v392
  %v481 = vpack.c.b16 %v395, %v394
  %v482 = vpack.c.b16 %v397, %v396
  %v483 = vpack.c.b16 %v399, %v398
  %v484 = vpack.c.b16 %v401, %v400
  %v485 = vpack.c.b16 %v403, %v402
  %v486 = vpack.c.b16 %v405, %v404
  %v487 = vpack.c.b16 %v407, %v406
  %v488 = vpack.c.b16 %v409, %v408
  %v489 = vpack.c.b16 %v411, %v410
  %v490 = vpack.c.b16 %v413, %v412
  %v491 = vpack.c.b16 %v415, %v414
  %v492 = vpack.c.b16 %v417, %v416
  %v493 = vpack.c.b16 %v419, %v418
  %v494 = vpack.c.b16 %v421, %v420
  %v495 = vpack.c.b16 %v423, %v422
  %v496 = vpack.c.b16 %v425, %v424
  %v497 = vpack.c.b16 %v427, %v426
  %v498 = vpack.c.b16 %v429, %v428
  %v499 = vpack.c.b16 %v431, %v430
  %v500 = vpack.c.b16 %v433, %v432
  %v501 = vpack.c.b16 %v435, %v434
  %v502 = vpack.c.b16 %v437, %v436
  %v503 = vpack.c.b16 %v439, %v438
  %568 = vmatprep.subr.bf16.mxu0 0
  %569 = vmatpush1.bf16.msra.mxu0 %v440
  %570 = vmatprep.subr.bf16.mxu0 0
  %571 = vmatpush1.bf16.msra.mxu0 %v441
  %572 = vmatprep.subr.bf16.mxu0 0
  %573 = vmatpush1.bf16.msra.mxu0 %v442
  %574 = vmatprep.subr.bf16.mxu0 0
  %575 = vmatpush1.bf16.msra.mxu0 %v443
  %576 = vmatprep.subr.bf16.mxu0 0
  %577 = vmatpush1.bf16.msra.mxu0 %v444
  %578 = vmatprep.subr.bf16.mxu0 0
  %579 = vmatpush1.bf16.msra.mxu0 %v445
  %580 = vmatprep.subr.bf16.mxu0 0
  %581 = vmatpush1.bf16.msra.mxu0 %v446
  %582 = vmatprep.subr.bf16.mxu0 0
  %583 = vmatpush1.bf16.msra.mxu0 %v447
  %584 = vmatprep.subr.bf16.mxu0 0
  %585 = vmatpush1.bf16.msra.mxu0 %v448
  %586 = vmatprep.subr.bf16.mxu0 0
  %587 = vmatpush1.bf16.msra.mxu0 %v449
  %588 = vmatprep.subr.bf16.mxu0 0
  %589 = vmatpush1.bf16.msra.mxu0 %v450
  %590 = vmatprep.subr.bf16.mxu0 0
  %591 = vmatpush1.bf16.msra.mxu0 %v451
  %592 = vmatprep.subr.bf16.mxu0 0
  %593 = vmatpush1.bf16.msra.mxu0 %v452
  %594 = vmatprep.subr.bf16.mxu0 0
  %595 = vmatpush1.bf16.msra.mxu0 %v453
  %596 = vmatprep.subr.bf16.mxu0 0
  %597 = vmatpush1.bf16.msra.mxu0 %v454
  %598 = vmatprep.subr.bf16.mxu0 0
  %599 = vmatpush1.bf16.msra.mxu0 %v455
  %600 = vmatprep.mubr.bf16.mxu0 %v169
  %601 = vmatmul.mubr.bf16.gmra.mrb[0].mxu0 %v168
  %v602 = vpop.f32.mrb[0].mxu0
  %v603 = vadd.f32 0.0, %v602
  %v604 = vpop.f32.mrb[0].mxu0
  %v605 = vpop.f32.mrb[0].mxu0
  %v606 = vpop.f32.mrb[0].mxu0
  %607 = vdwg.mxu0
  %608 = vmatprep.subr.bf16.mxu0 0
  %609 = vmatpush1.bf16.msra.mxu0 %v456
  %610 = vmatprep.subr.bf16.mxu0 0
  %611 = vmatpush1.bf16.msra.mxu0 %v457
  %612 = vmatprep.subr.bf16.mxu0 0
  %613 = vmatpush1.bf16.msra.mxu0 %v458
  %614 = vmatprep.subr.bf16.mxu0 0
  %615 = vmatpush1.bf16.msra.mxu0 %v459
  %616 = vmatprep.subr.bf16.mxu0 0
  %617 = vmatpush1.bf16.msra.mxu0 %v460
  %618 = vmatprep.subr.bf16.mxu0 0
  %619 = vmatpush1.bf16.msra.mxu0 %v461
  %620 = vmatprep.subr.bf16.mxu0 0
  %621 = vmatpush1.bf16.msra.mxu0 %v462
  %622 = vmatprep.subr.bf16.mxu0 0
  %623 = vmatpush1.bf16.msra.mxu0 %v463
  %624 = vmatprep.subr.bf16.mxu0 0
  %625 = vmatpush1.bf16.msra.mxu0 %v464
  %626 = vmatprep.subr.bf16.mxu0 0
  %627 = vmatpush1.bf16.msra.mxu0 %v465
  %628 = vmatprep.subr.bf16.mxu0 0
  %629 = vmatpush1.bf16.msra.mxu0 %v466
  %630 = vmatprep.subr.bf16.mxu0 0
  %631 = vmatpush1.bf16.msra.mxu0 %v467
  %632 = vmatprep.subr.bf16.mxu0 0
  %633 = vmatpush1.bf16.msra.mxu0 %v468
  %634 = vmatprep.subr.bf16.mxu0 0
  %635 = vmatpush1.bf16.msra.mxu0 %v469
  %636 = vmatprep.subr.bf16.mxu0 0
  %637 = vmatpush1.bf16.msra.mxu0 %v470
  %638 = vmatprep.subr.bf16.mxu0 0
  %639 = vmatpush1.bf16.msra.mxu0 %v471
  %640 = vmatprep.mubr.bf16.mxu0 %v171
  %641 = vmatmul.mubr.bf16.gmra.mrb[0].mxu0 %v170
  %v642 = vpop.f32.mrb[0].mxu0
  %v643 = vadd.f32 %v603, %v642
  %v644 = vpop.f32.mrb[0].mxu0
  %v645 = vpop.f32.mrb[0].mxu0
  %v646 = vpop.f32.mrb[0].mxu0
  %647 = vdwg.mxu0
  %648 = vmatprep.subr.bf16.mxu0 0
  %649 = vmatpush1.bf16.msra.mxu0 %v472
  %650 = vmatprep.subr.bf16.mxu0 0
  %651 = vmatpush1.bf16.msra.mxu0 %v473
  %652 = vmatprep.subr.bf16.mxu0 0
  %653 = vmatpush1.bf16.msra.mxu0 %v474
  %654 = vmatprep.subr.bf16.mxu0 0
  %655 = vmatpush1.bf16.msra.mxu0 %v475
  %656 = vmatprep.subr.bf16.mxu0 0
  %657 = vmatpush1.bf16.msra.mxu0 %v476
  %658 = vmatprep.subr.bf16.mxu0 0
  %659 = vmatpush1.bf16.msra.mxu0 %v477
  %660 = vmatprep.subr.bf16.mxu0 0
  %661 = vmatpush1.bf16.msra.mxu0 %v478
  %662 = vmatprep.subr.bf16.mxu0 0
  %663 = vmatpush1.bf16.msra.mxu0 %v479
  %664 = vmatprep.subr.bf16.mxu0 0
  %665 = vmatpush1.bf16.msra.mxu0 %v480
  %666 = vmatprep.subr.bf16.mxu0 0
  %667 = vmatpush1.bf16.msra.mxu0 %v481
  %668 = vmatprep.subr.bf16.mxu0 0
  %669 = vmatpush1.bf16.msra.mxu0 %v482
  %670 = vmatprep.subr.bf16.mxu0 0
  %671 = vmatpush1.bf16.msra.mxu0 %v483
  %672 = vmatprep.subr.bf16.mxu0 0
  %673 = vmatpush1.bf16.msra.mxu0 %v484
  %674 = vmatprep.subr.bf16.mxu0 0
  %675 = vmatpush1.bf16.msra.mxu0 %v485
  %676 = vmatprep.subr.bf16.mxu0 0
  %677 = vmatpush1.bf16.msra.mxu0 %v486
  %678 = vmatprep.subr.bf16.mxu0 0
  %679 = vmatpush1.bf16.msra.mxu0 %v487
  %680 = vmatprep.mubr.bf16.mxu0 %v173
  %681 = vmatmul.mubr.bf16.gmra.mrb[0].mxu0 %v172
  %v682 = vpop.f32.mrb[0].mxu0
  %v683 = vadd.f32 %v643, %v682
  %v684 = vpop.f32.mrb[0].mxu0
  %v685 = vpop.f32.mrb[0].mxu0
  %v686 = vpop.f32.mrb[0].mxu0
  %687 = vdwg.mxu0
  %688 = vmatprep.subr.bf16.mxu0 0
  %689 = vmatpush1.bf16.msra.mxu0 %v488
  %690 = vmatprep.subr.bf16.mxu0 0
  %691 = vmatpush1.bf16.msra.mxu0 %v489
  %692 = vmatprep.subr.bf16.mxu0 0
  %693 = vmatpush1.bf16.msra.mxu0 %v490
  %694 = vmatprep.subr.bf16.mxu0 0
  %695 = vmatpush1.bf16.msra.mxu0 %v491
  %696 = vmatprep.subr.bf16.mxu0 0
  %697 = vmatpush1.bf16.msra.mxu0 %v492
  %698 = vmatprep.subr.bf16.mxu0 0
  %699 = vmatpush1.bf16.msra.mxu0 %v493
  %700 = vmatprep.subr.bf16.mxu0 0
  %701 = vmatpush1.bf16.msra.mxu0 %v494
  %702 = vmatprep.subr.bf16.mxu0 0
  %703 = vmatpush1.bf16.msra.mxu0 %v495
  %704 = vmatprep.subr.bf16.mxu0 0
  %705 = vmatpush1.bf16.msra.mxu0 %v496
  %706 = vmatprep.subr.bf16.mxu0 0
  %707 = vmatpush1.bf16.msra.mxu0 %v497
  %708 = vmatprep.subr.bf16.mxu0 0
  %709 = vmatpush1.bf16.msra.mxu0 %v498
  %710 = vmatprep.subr.bf16.mxu0 0
  %711 = vmatpush1.bf16.msra.mxu0 %v499
  %712 = vmatprep.subr.bf16.mxu0 0
  %713 = vmatpush1.bf16.msra.mxu0 %v500
  %714 = vmatprep.subr.bf16.mxu0 0
  %715 = vmatpush1.bf16.msra.mxu0 %v501
  %716 = vmatprep.subr.bf16.mxu0 0
  %717 = vmatpush1.bf16.msra.mxu0 %v502
  %718 = vmatprep.subr.bf16.mxu0 0
  %719 = vmatpush1.bf16.msra.mxu0 %v503
  %720 = vmatprep.mubr.bf16.mxu0 %v175
  %721 = vmatmul.mubr.bf16.gmra.mrb[0].mxu0 %v174
  %v722 = vpop.f32.mrb[0].mxu0
  %v723 = vadd.f32 %v683, %v722
  %v724 = vpop.f32.mrb[0].mxu0
  %v725 = vpop.f32.mrb[0].mxu0
  %v726 = vpop.f32.mrb[0].mxu0
  %727 = vdwg.mxu0
  %v728 = vpack.c.bf16 %v723, %v723
  %v729 = vld [vmem:[%s2] sm:$0xff]
  %v730 = vld [vmem:[%s2 + $0x8] sm:$0xff]
  %v731 = vld [vmem:[%s2 + $0x10] sm:$0xff]
  %v732 = vld [vmem:[%s2 + $0x18] sm:$0xff]
  %v733 = vld [vmem:[%s2 + $0x20] sm:$0xff]
  %v734 = vld [vmem:[%s2 + $0x28] sm:$0xff]
  %v735 = vld [vmem:[%s2 + $0x30] sm:$0xff]
  %v736 = vld [vmem:[%s2 + $0x38] sm:$0xff]
  %v737 = vld [vmem:[%s2 + $0x40] sm:$0xff]
  %v738 = vld [vmem:[%s2 + $0x48] sm:$0xff]
  %v739 = vld [vmem:[%s2 + $0x50] sm:$0xff]
  %v740 = vld [vmem:[%s2 + $0x58] sm:$0xff]
  %v741 = vld [vmem:[%s2 + $0x60] sm:$0xff]
  %v742 = vld [vmem:[%s2 + $0x68] sm:$0xff]
  %v743 = vld [vmem:[%s2 + $0x70] sm:$0xff]
  %v744 = vld [vmem:[%s2 + $0x78] sm:$0xff]
  %v745 = vld [vmem:[%s3] sm:$0xf]
  %v747 = vlaneseq
  %v748 = vshrl.u32 %v747, 7
  %v749 = vsub.s32 0, %v748
  %v750 = vrot.slane %v745, %v749
  %v751 = vlaneseq
  %v752 = vshrl.u32 %v751, 7
  %v753 = vsub.s32 1, %v752
  %v754 = vrot.slane %v745, %v753
  %v755 = vlaneseq
  %v756 = vshrl.u32 %v755, 7
  %v757 = vsub.s32 2, %v756
  %v758 = vrot.slane %v745, %v757
  %v759 = vlaneseq
  %v760 = vshrl.u32 %v759, 7
  %v761 = vsub.s32 3, %v760
  %v762 = vrot.slane %v745, %v761
  %v783 = vunpack.c.l.b16 %v729
  %v784 = vunpack.c.h.b16 %v729
  %v785 = vunpack.c.l.b16 %v730
  %v786 = vunpack.c.h.b16 %v730
  %v787 = vunpack.c.l.b16 %v731
  %v788 = vunpack.c.h.b16 %v731
  %v789 = vunpack.c.l.b16 %v732
  %v790 = vunpack.c.h.b16 %v732
  %v791 = vunpack.c.l.b16 %v733
  %v792 = vunpack.c.h.b16 %v733
  %v793 = vunpack.c.l.b16 %v734
  %v794 = vunpack.c.h.b16 %v734
  %v795 = vunpack.c.l.b16 %v735
  %v796 = vunpack.c.h.b16 %v735
  %v797 = vunpack.c.l.b16 %v736
  %v798 = vunpack.c.h.b16 %v736
  %v799 = vunpack.c.l.b16 %v737
  %v800 = vunpack.c.h.b16 %v737
  %v801 = vunpack.c.l.b16 %v738
  %v802 = vunpack.c.h.b16 %v738
  %v803 = vunpack.c.l.b16 %v739
  %v804 = vunpack.c.h.b16 %v739
  %v805 = vunpack.c.l.b16 %v740
  %v806 = vunpack.c.h.b16 %v740
  %v807 = vunpack.c.l.b16 %v741
  %v808 = vunpack.c.h.b16 %v741
  %v809 = vunpack.c.l.b16 %v742
  %v810 = vunpack.c.h.b16 %v742
  %v811 = vunpack.c.l.b16 %v743
  %v812 = vunpack.c.h.b16 %v743
  %v813 = vunpack.c.l.b16 %v744
  %v814 = vunpack.c.h.b16 %v744
  %v815 = vpack.c.b16 %v787, %v783
  %v816 = vpack.c.b16 %v788, %v784
  %v817 = vpack.c.b16 %v789, %v785
  %v818 = vpack.c.b16 %v790, %v786
  %v819 = vpack.c.b16 %v795, %v791
  %v820 = vpack.c.b16 %v796, %v792
  %v821 = vpack.c.b16 %v797, %v793
  %v822 = vpack.c.b16 %v798, %v794
  %v823 = vpack.c.b16 %v803, %v799
  %v824 = vpack.c.b16 %v804, %v800
  %v825 = vpack.c.b16 %v805, %v801
  %v826 = vpack.c.b16 %v806, %v802
  %v827 = vpack.c.b16 %v811, %v807
  %v828 = vpack.c.b16 %v812, %v808
  %v829 = vpack.c.b16 %v813, %v809
  %v830 = vpack.c.b16 %v814, %v810
  %vm847 = vcmask 523264
  %v849 = vsel %vm847, %v728, 0
  %851 = vmatprep.subr.bf16.mxu0 %v816
  %852 = vmatpush1.bf16.msra.mxu0 %v815
  %853 = vmatprep.subr.bf16.mxu0 %v820
  %854 = vmatpush1.bf16.msra.mxu0 %v819
  %855 = vmatprep.subr.bf16.mxu0 %v824
  %856 = vmatpush1.bf16.msra.mxu0 %v823
  %857 = vmatprep.subr.bf16.mxu0 %v828
  %858 = vmatpush1.bf16.msra.mxu0 %v827
  %859 = vmatprep.subr.bf16.mxu0 0
  %860 = vmatpush1.bf16.msra.mxu0 0
  %861 = vmatprep.subr.bf16.mxu0 0
  %862 = vmatpush1.bf16.msra.mxu0 0
  %863 = vmatprep.subr.bf16.mxu0 0
  %864 = vmatpush1.bf16.msra.mxu0 0
  %865 = vmatprep.subr.bf16.mxu0 0
  %866 = vmatpush1.bf16.msra.mxu0 0
  %867 = vmatprep.subr.bf16.mxu0 0
  %868 = vmatpush1.bf16.msra.mxu0 0
  %869 = vmatprep.subr.bf16.mxu0 0
  %870 = vmatpush1.bf16.msra.mxu0 0
  %871 = vmatprep.subr.bf16.mxu0 0
  %872 = vmatpush1.bf16.msra.mxu0 0
  %873 = vmatprep.subr.bf16.mxu0 0
  %874 = vmatpush1.bf16.msra.mxu0 0
  %875 = vmatprep.subr.bf16.mxu0 0
  %876 = vmatpush1.bf16.msra.mxu0 0
  %877 = vmatprep.subr.bf16.mxu0 0
  %878 = vmatpush1.bf16.msra.mxu0 0
  %879 = vmatprep.subr.bf16.mxu0 0
  %880 = vmatpush1.bf16.msra.mxu0 0
  %881 = vmatprep.subr.bf16.mxu0 0
  %882 = vmatpush1.bf16.msra.mxu0 0
  %883 = vmatprep.mubr.bf16.mxu0 0
  %884 = vmatmul.mubr.bf16.gmra.mrb[0].mxu0 %v849
  %v885 = vpop.f32.mrb[0].mxu0
  %v886 = vadd.f32 %v750, %v885
  %v887 = vpop.f32.mrb[0].mxu0
  %v888 = vadd.f32 %v754, %v887
  %v889 = vpop.f32.mrb[0].mxu0
  %v890 = vpop.f32.mrb[0].mxu0
  %891 = vdwg.mxu0
  %892 = vmatprep.subr.bf16.mxu0 %v818
  %893 = vmatpush1.bf16.msra.mxu0 %v817
  %894 = vmatprep.subr.bf16.mxu0 %v822
  %895 = vmatpush1.bf16.msra.mxu0 %v821
  %896 = vmatprep.subr.bf16.mxu0 %v826
  %897 = vmatpush1.bf16.msra.mxu0 %v825
  %898 = vmatprep.subr.bf16.mxu0 %v830
  %899 = vmatpush1.bf16.msra.mxu0 %v829
  %900 = vmatprep.subr.bf16.mxu0 0
  %901 = vmatpush1.bf16.msra.mxu0 0
  %902 = vmatprep.subr.bf16.mxu0 0
  %903 = vmatpush1.bf16.msra.mxu0 0
  %904 = vmatprep.subr.bf16.mxu0 0
  %905 = vmatpush1.bf16.msra.mxu0 0
  %906 = vmatprep.subr.bf16.mxu0 0
  %907 = vmatpush1.bf16.msra.mxu0 0
  %908 = vmatprep.subr.bf16.mxu0 0
  %909 = vmatpush1.bf16.msra.mxu0 0
  %910 = vmatprep.subr.bf16.mxu0 0
  %911 = vmatpush1.bf16.msra.mxu0 0
  %912 = vmatprep.subr.bf16.mxu0 0
  %913 = vmatpush1.bf16.msra.mxu0 0
  %914 = vmatprep.subr.bf16.mxu0 0
  %915 = vmatpush1.bf16.msra.mxu0 0
  %916 = vmatprep.subr.bf16.mxu0 0
  %917 = vmatpush1.bf16.msra.mxu0 0
  %918 = vmatprep.subr.bf16.mxu0 0
  %919 = vmatpush1.bf16.msra.mxu0 0
  %920 = vmatprep.subr.bf16.mxu0 0
  %921 = vmatpush1.bf16.msra.mxu0 0
  %922 = vmatprep.subr.bf16.mxu0 0
  %923 = vmatpush1.bf16.msra.mxu0 0
  %924 = vmatprep.mubr.bf16.mxu0 0
  %925 = vmatmul.mubr.bf16.gmra.mrb[0].mxu0 %v849
  %v926 = vpop.f32.mrb[0].mxu0
  %v927 = vadd.f32 %v758, %v926
  %v928 = vpop.f32.mrb[0].mxu0
  %v929 = vadd.f32 %v762, %v928
  %v930 = vpop.f32.mrb[0].mxu0
  %v931 = vpop.f32.mrb[0].mxu0
  %932 = vdwg.mxu0
  %v933 = vmax.f32 %v886, 0.0
  %v934 = vmax.f32 %v888, 0.0
  %v935 = vmax.f32 %v927, 0.0
  %v936 = vmax.f32 %v929, 0.0
  %v937 = vpack.c.bf16 %v933, %v933
  %v938 = vpack.c.bf16 %v934, %v934
  %v939 = vpack.c.bf16 %v935, %v935
  %v940 = vpack.c.bf16 %v936, %v936
  %v941 = vld [vmem:[%s4] sm:$0xf]
  %v942 = vld [vmem:[%s4 + $0x4] sm:$0xf]
  %v943 = vld [vmem:[%s4 + $0x8] sm:$0xf]
  %v944 = vld [vmem:[%s4 + $0xc] sm:$0xf]
  %v945 = vld [vmem:[%s4 + $0x10] sm:$0xf]
  %v946 = vld [vmem:[%s4 + $0x14] sm:$0xf]
  %v947 = vld [vmem:[%s4 + $0x18] sm:$0xf]
  %v948 = vld [vmem:[%s4 + $0x1c] sm:$0xf]
  %v949 = vld [vmem:[%s4 + $0x20] sm:$0xf]
  %v950 = vld [vmem:[%s4 + $0x24] sm:$0xf]
  %v951 = vld [vmem:[%s4 + $0x28] sm:$0xf]
  %v952 = vld [vmem:[%s4 + $0x2c] sm:$0xf]
  %v953 = vld [vmem:[%s4 + $0x30] sm:$0xf]
  %v954 = vld [vmem:[%s4 + $0x34] sm:$0xf]
  %v955 = vld [vmem:[%s4 + $0x38] sm:$0xf]
  %v956 = vld [vmem:[%s4 + $0x3c] sm:$0xf]
  %v957 = vld [vmem:[%s4 + $0x40] sm:$0xf]
  %v958 = vld [vmem:[%s4 + $0x44] sm:$0xf]
  %v959 = vld [vmem:[%s4 + $0x48] sm:$0xf]
  %v960 = vld [vmem:[%s4 + $0x4c] sm:$0xf]
  %v961 = vld [vmem:[%s4 + $0x50] sm:$0xf]
  %v962 = vld [vmem:[%s4 + $0x54] sm:$0xf]
  %v963 = vld [vmem:[%s4 + $0x58] sm:$0xf]
  %v964 = vld [vmem:[%s4 + $0x5c] sm:$0xf]
  %v965 = vld [vmem:[%s4 + $0x60] sm:$0xf]
  %v966 = vld [vmem:[%s4 + $0x64] sm:$0xf]
  %v967 = vld [vmem:[%s4 + $0x68] sm:$0xf]
  %v968 = vld [vmem:[%s4 + $0x6c] sm:$0xf]
  %v969 = vld [vmem:[%s4 + $0x70] sm:$0xf]
  %v970 = vld [vmem:[%s4 + $0x74] sm:$0xf]
  %v971 = vld [vmem:[%s4 + $0x78] sm:$0xf]
  %v972 = vld [vmem:[%s4 + $0x7c] sm:$0xf]
  %v973 = vld [vmem:[%s4 + $0x80] sm:$0xf]
  %v974 = vld [vmem:[%s4 + $0x84] sm:$0xf]
  %v975 = vld [vmem:[%s4 + $0x88] sm:$0xf]
  %v976 = vld [vmem:[%s4 + $0x8c] sm:$0xf]
  %v977 = vld [vmem:[%s4 + $0x90] sm:$0xf]
  %v978 = vld [vmem:[%s4 + $0x94] sm:$0xf]
  %v979 = vld [vmem:[%s4 + $0x98] sm:$0xf]
  %v980 = vld [vmem:[%s4 + $0x9c] sm:$0xf]
  %v981 = vld [vmem:[%s4 + $0xa0] sm:$0xf]
  %v982 = vld [vmem:[%s4 + $0xa4] sm:$0xf]
  %v983 = vld [vmem:[%s4 + $0xa8] sm:$0xf]
  %v984 = vld [vmem:[%s4 + $0xac] sm:$0xf]
  %v985 = vld [vmem:[%s4 + $0xb0] sm:$0xf]
  %v986 = vld [vmem:[%s4 + $0xb4] sm:$0xf]
  %v987 = vld [vmem:[%s4 + $0xb8] sm:$0xf]
  %v988 = vld [vmem:[%s4 + $0xbc] sm:$0xf]
  %v989 = vld [vmem:[%s4 + $0xc0] sm:$0xf]
  %v990 = vld [vmem:[%s4 + $0xc4] sm:$0xf]
  %v991 = vld [vmem:[%s4 + $0xc8] sm:$0xf]
  %v992 = vld [vmem:[%s4 + $0xcc] sm:$0xf]
  %v993 = vld [vmem:[%s4 + $0xd0] sm:$0xf]
  %v994 = vld [vmem:[%s4 + $0xd4] sm:$0xf]
  %v995 = vld [vmem:[%s4 + $0xd8] sm:$0xf]
  %v996 = vld [vmem:[%s4 + $0xdc] sm:$0xf]
  %v997 = vld [vmem:[%s4 + $0xe0] sm:$0xf]
  %v998 = vld [vmem:[%s4 + $0xe4] sm:$0xf]
  %v999 = vld [vmem:[%s4 + $0xe8] sm:$0xf]
  %v1000 = vld [vmem:[%s4 + $0xec] sm:$0xf]
  %v1001 = vld [vmem:[%s4 + $0xf0] sm:$0xf]
  %v1002 = vld [vmem:[%s4 + $0xf4] sm:$0xf]
  %v1003 = vld [vmem:[%s4 + $0xf8] sm:$0xf]
  %v1004 = vld [vmem:[%s4 + $0xfc] sm:$0xf]
  %v1005 = vld [vmem:[%s5] sm:$0x1]
  %v1007 = vlaneseq
  %v1008 = vshrl.u32 %v1007, 7
  %v1009 = vsub.s32 0, %v1008
  %v1010 = vrot.slane %v1005, %v1009
  %v1076 = vunpack.c.l.b16 %v941
  %v1077 = vunpack.c.l.b16 %v942
  %v1078 = vunpack.c.l.b16 %v943
  %v1079 = vunpack.c.l.b16 %v944
  %v1080 = vunpack.c.l.b16 %v945
  %v1081 = vunpack.c.l.b16 %v946
  %v1082 = vunpack.c.l.b16 %v947
  %v1083 = vunpack.c.l.b16 %v948
  %v1084 = vunpack.c.l.b16 %v949
  %v1085 = vunpack.c.l.b16 %v950
  %v1086 = vunpack.c.l.b16 %v951
  %v1087 = vunpack.c.l.b16 %v952
  %v1088 = vunpack.c.l.b16 %v953
  %v1089 = vunpack.c.l.b16 %v954
  %v1090 = vunpack.c.l.b16 %v955
  %v1091 = vunpack.c.l.b16 %v956
  %v1092 = vunpack.c.l.b16 %v957
  %v1093 = vunpack.c.l.b16 %v958
  %v1094 = vunpack.c.l.b16 %v959
  %v1095 = vunpack.c.l.b16 %v960
  %v1096 = vunpack.c.l.b16 %v961
  %v1097 = vunpack.c.l.b16 %v962
  %v1098 = vunpack.c.l.b16 %v963
  %v1099 = vunpack.c.l.b16 %v964
  %v1100 = vunpack.c.l.b16 %v965
  %v1101 = vunpack.c.l.b16 %v966
  %v1102 = vunpack.c.l.b16 %v967
  %v1103 = vunpack.c.l.b16 %v968
  %v1104 = vunpack.c.l.b16 %v969
  %v1105 = vunpack.c.l.b16 %v970
  %v1106 = vunpack.c.l.b16 %v971
  %v1107 = vunpack.c.l.b16 %v972
  %v1108 = vunpack.c.l.b16 %v973
  %v1109 = vunpack.c.l.b16 %v974
  %v1110 = vunpack.c.l.b16 %v975
  %v1111 = vunpack.c.l.b16 %v976
  %v1112 = vunpack.c.l.b16 %v977
  %v1113 = vunpack.c.l.b16 %v978
  %v1114 = vunpack.c.l.b16 %v979
  %v1115 = vunpack.c.l.b16 %v980
  %v1116 = vunpack.c.l.b16 %v981
  %v1117 = vunpack.c.l.b16 %v982
  %v1118 = vunpack.c.l.b16 %v983
  %v1119 = vunpack.c.l.b16 %v984
  %v1120 = vunpack.c.l.b16 %v985
  %v1121 = vunpack.c.l.b16 %v986
  %v1122 = vunpack.c.l.b16 %v987
  %v1123 = vunpack.c.l.b16 %v988
  %v1124 = vunpack.c.l.b16 %v989
  %v1125 = vunpack.c.l.b16 %v990
  %v1126 = vunpack.c.l.b16 %v991
  %v1127 = vunpack.c.l.b16 %v992
  %v1128 = vunpack.c.l.b16 %v993
  %v1129 = vunpack.c.l.b16 %v994
  %v1130 = vunpack.c.l.b16 %v995
  %v1131 = vunpack.c.l.b16 %v996
  %v1132 = vunpack.c.l.b16 %v997
  %v1133 = vunpack.c.l.b16 %v998
  %v1134 = vunpack.c.l.b16 %v999
  %v1135 = vunpack.c.l.b16 %v1000
  %v1136 = vunpack.c.l.b16 %v1001
  %v1137 = vunpack.c.l.b16 %v1002
  %v1138 = vunpack.c.l.b16 %v1003
  %v1139 = vunpack.c.l.b16 %v1004
  %v1140 = vpack.c.b16 %v1077, %v1076
  %v1141 = vpack.c.b16 %v1079, %v1078
  %v1142 = vpack.c.b16 %v1081, %v1080
  %v1143 = vpack.c.b16 %v1083, %v1082
  %v1144 = vpack.c.b16 %v1085, %v1084
  %v1145 = vpack.c.b16 %v1087, %v1086
  %v1146 = vpack.c.b16 %v1089, %v1088
  %v1147 = vpack.c.b16 %v1091, %v1090
  %v1148 = vpack.c.b16 %v1093, %v1092
  %v1149 = vpack.c.b16 %v1095, %v1094
  %v1150 = vpack.c.b16 %v1097, %v1096
  %v1151 = vpack.c.b16 %v1099, %v1098
  %v1152 = vpack.c.b16 %v1101, %v1100
  %v1153 = vpack.c.b16 %v1103, %v1102
  %v1154 = vpack.c.b16 %v1105, %v1104
  %v1155 = vpack.c.b16 %v1107, %v1106
  %v1156 = vpack.c.b16 %v1109, %v1108
  %v1157 = vpack.c.b16 %v1111, %v1110
  %v1158 = vpack.c.b16 %v1113, %v1112
  %v1159 = vpack.c.b16 %v1115, %v1114
  %v1160 = vpack.c.b16 %v1117, %v1116
  %v1161 = vpack.c.b16 %v1119, %v1118
  %v1162 = vpack.c.b16 %v1121, %v1120
  %v1163 = vpack.c.b16 %v1123, %v1122
  %v1164 = vpack.c.b16 %v1125, %v1124
  %v1165 = vpack.c.b16 %v1127, %v1126
  %v1166 = vpack.c.b16 %v1129, %v1128
  %v1167 = vpack.c.b16 %v1131, %v1130
  %v1168 = vpack.c.b16 %v1133, %v1132
  %v1169 = vpack.c.b16 %v1135, %v1134
  %v1170 = vpack.c.b16 %v1137, %v1136
  %v1171 = vpack.c.b16 %v1139, %v1138
  %1204 = vmatprep.subr.bf16.mxu0 0
  %1205 = vmatpush1.bf16.msra.mxu0 %v1140
  %1206 = vmatprep.subr.bf16.mxu0 0
  %1207 = vmatpush1.bf16.msra.mxu0 %v1141
  %1208 = vmatprep.subr.bf16.mxu0 0
  %1209 = vmatpush1.bf16.msra.mxu0 %v1142
  %1210 = vmatprep.subr.bf16.mxu0 0
  %1211 = vmatpush1.bf16.msra.mxu0 %v1143
  %1212 = vmatprep.subr.bf16.mxu0 0
  %1213 = vmatpush1.bf16.msra.mxu0 %v1144
  %1214 = vmatprep.subr.bf16.mxu0 0
  %1215 = vmatpush1.bf16.msra.mxu0 %v1145
  %1216 = vmatprep.subr.bf16.mxu0 0
  %1217 = vmatpush1.bf16.msra.mxu0 %v1146
  %1218 = vmatprep.subr.bf16.mxu0 0
  %1219 = vmatpush1.bf16.msra.mxu0 %v1147
  %1220 = vmatprep.subr.bf16.mxu0 0
  %1221 = vmatpush1.bf16.msra.mxu0 %v1148
  %1222 = vmatprep.subr.bf16.mxu0 0
  %1223 = vmatpush1.bf16.msra.mxu0 %v1149
  %1224 = vmatprep.subr.bf16.mxu0 0
  %1225 = vmatpush1.bf16.msra.mxu0 %v1150
  %1226 = vmatprep.subr.bf16.mxu0 0
  %1227 = vmatpush1.bf16.msra.mxu0 %v1151
  %1228 = vmatprep.subr.bf16.mxu0 0
  %1229 = vmatpush1.bf16.msra.mxu0 %v1152
  %1230 = vmatprep.subr.bf16.mxu0 0
  %1231 = vmatpush1.bf16.msra.mxu0 %v1153
  %1232 = vmatprep.subr.bf16.mxu0 0
  %1233 = vmatpush1.bf16.msra.mxu0 %v1154
  %1234 = vmatprep.subr.bf16.mxu0 0
  %1235 = vmatpush1.bf16.msra.mxu0 %v1155
  %1236 = vmatprep.mubr.bf16.mxu0 %v938
  %1237 = vmatmul.mubr.bf16.gmra.mrb[0].mxu0 %v937
  %v1238 = vpop.f32.mrb[0].mxu0
  %v1239 = vadd.f32 %v1010, %v1238
  %v1240 = vpop.f32.mrb[0].mxu0
  %v1241 = vpop.f32.mrb[0].mxu0
  %v1242 = vpop.f32.mrb[0].mxu0
  %1243 = vdwg.mxu0
  %1244 = vmatprep.subr.bf16.mxu0 0
  %1245 = vmatpush1.bf16.msra.mxu0 %v1156
  %1246 = vmatprep.subr.bf16.mxu0 0
  %1247 = vmatpush1.bf16.msra.mxu0 %v1157
  %1248 = vmatprep.subr.bf16.mxu0 0
  %1249 = vmatpush1.bf16.msra.mxu0 %v1158
  %1250 = vmatprep.subr.bf16.mxu0 0
  %1251 = vmatpush1.bf16.msra.mxu0 %v1159
  %1252 = vmatprep.subr.bf16.mxu0 0
  %1253 = vmatpush1.bf16.msra.mxu0 %v1160
  %1254 = vmatprep.subr.bf16.mxu0 0
  %1255 = vmatpush1.bf16.msra.mxu0 %v1161
  %1256 = vmatprep.subr.bf16.mxu0 0
  %1257 = vmatpush1.bf16.msra.mxu0 %v1162
  %1258 = vmatprep.subr.bf16.mxu0 0
  %1259 = vmatpush1.bf16.msra.mxu0 %v1163
  %1260 = vmatprep.subr.bf16.mxu0 0
  %1261 = vmatpush1.bf16.msra.mxu0 %v1164
  %1262 = vmatprep.subr.bf16.mxu0 0
  %1263 = vmatpush1.bf16.msra.mxu0 %v1165
  %1264 = vmatprep.subr.bf16.mxu0 0
  %1265 = vmatpush1.bf16.msra.mxu0 %v1166
  %1266 = vmatprep.subr.bf16.mxu0 0
  %1267 = vmatpush1.bf16.msra.mxu0 %v1167
  %1268 = vmatprep.subr.bf16.mxu0 0
  %1269 = vmatpush1.bf16.msra.mxu0 %v1168
  %1270 = vmatprep.subr.bf16.mxu0 0
  %1271 = vmatpush1.bf16.msra.mxu0 %v1169
  %1272 = vmatprep.subr.bf16.mxu0 0
  %1273 = vmatpush1.bf16.msra.mxu0 %v1170
  %1274 = vmatprep.subr.bf16.mxu0 0
  %1275 = vmatpush1.bf16.msra.mxu0 %v1171
  %1276 = vmatprep.mubr.bf16.mxu0 %v940
  %1277 = vmatmul.mubr.bf16.gmra.mrb[0].mxu0 %v939
  %v1278 = vpop.f32.mrb[0].mxu0
  %v1279 = vadd.f32 %v1239, %v1278
  %v1280 = vpop.f32.mrb[0].mxu0
  %v1281 = vpop.f32.mrb[0].mxu0
  %v1282 = vpop.f32.mrb[0].mxu0
  %1283 = vdwg.mxu0
  %1284 = vst [vmem:[%s6] sm:$0xff] %v1279
  // Predicated region
  $region26: #{early_exit_forward.1} parent=0 // pred_check
    _
  $region27: #{early_exit_forward.1} parent=0 // pred_check_branch
    %1286 = sbr.rel (0) target = $region29
  $region28: #{early_exit_forward.1} parent=0 // pred_region
    _
  $region29: #{early_exit_forward.1} parent=0 // pred_fallthru
    _
  // Predicated region
  $region30: #{early_exit_forward.1} parent=0 // pred_check
    _
  $region31: #{early_exit_forward.1} parent=0 // pred_check_branch
    %1288 = sbr.rel (0) target = $region33
  $region32: #{early_exit_forward.1} parent=0 // pred_region
    _
  $region33: #{early_exit_forward.1} parent=0 // pred_fallthru
    _

</llo_original>
